<compile_context>
chip_gen: v6e
topology: v6e:2x2x1
jax: 0.10.0
libtpu: 0.0.40
codegen_flags: <defaults>
</compile_context>

<pallas_src>
import jax
import jax.numpy as jnp
from jax.experimental import pallas as pl
from jax.experimental.pallas import tpu as pltpu


def _round_up(x, m):
    return ((x + m - 1) // m) * m


def _vmem_limit_bytes(footprint_bytes):
    """Scoped-VMEM budget: actual kernel footprint + compiler headroom, clamped
    to half the chip's physical VMEM (64 MiB on v7x, 128 MiB on v5e/v6e)."""
    try:
        cap = pltpu.get_tpu_info().vmem_capacity_bytes
    except Exception:
        cap = 64 * 1024 * 1024
    want = max(4 * footprint_bytes + (4 << 20), 16 << 20)
    return int(min(want, cap // 2))


# ---------------------------------------------------------------------------
# Pallas kernel: fused conv (all branches, pre-im2col'd) + masked max-pool
#                + bias/ReLU epilogue + FC classifier
# ---------------------------------------------------------------------------
def _kim2014_fused_kernel(x_ref,      # [TB, T_pad, k_max*E] bf16  im2col'd activations
                          w_ref,      # [k_max*E, F_pad]     bf16  fused conv weight
                          b_ref,      # [1, F_pad]           f32   fused conv bias
                          mask_ref,   # [T_pad, F_pad]       f32   0 valid / -inf invalid
                          fcw_ref,    # [F_pad, C_pad]       bf16  classifier weight
                          fcb_ref,    # [1, C_pad]           f32   classifier bias
                          out_ref):   # [TB, C_pad]          f32
    # All conv branches / taps as ONE MXU matmul over the 128-wide im2col axis.
    acc = jax.lax.dot_general(
        x_ref[...], w_ref[...],
        dimension_numbers=(((2,), (0,)), ((), ())),
        preferred_element_type=jnp.float32)            # [TB, T_pad, F_pad] f32

    # Per-branch time-validity mask (-inf where t >= L-k_i+1), max-pool over
    # time.  Bias + ReLU are hoisted past the pool (ReLU monotone, bias
    # time-invariant -> bit-for-bit equivalent) so they run on [TB, F_pad]
    # instead of [TB, T_pad, F_pad].
    acc = acc + mask_ref[...]
    pooled = jnp.maximum(jnp.max(acc, axis=1) + b_ref[...], 0.0)   # [TB, F_pad]

    # classifier (dropout = identity in eval mode), fused into the same kernel
    logits = jax.lax.dot_general(
        pooled.astype(fcw_ref.dtype), fcw_ref[...],
        dimension_numbers=(((1,), (0,)), ((), ())),
        preferred_element_type=jnp.float32)
    out_ref[...] = logits + fcb_ref[...]


# ---------------------------------------------------------------------------
# Wrapper: parameter fusion/padding, wrapper-side im2col, batch-tiled pallas_call
# ---------------------------------------------------------------------------
def kim2014_forward(x_embed, conv_weights, conv_biases, fc_w, fc_b,
                    filter_sizes, num_filters, *, batch_tile=None):
    """x_embed: [B, L, E] f32.  conv_weights[i]: [k_i, E, F_i].  Returns [B, C] f32."""
    B, L, E = x_embed.shape
    C = fc_w.shape[1]
    k_max = max(filter_sizes)
    f_total = sum(num_filters)
    assert k_max <= L, "filter_size > sequence length gives an empty conv output"

    if batch_tile is None:
        # Large enough to amortize per-grid-step overhead and feed the MXU
        # (M = batch_tile * t_pad), while keeping >= 2 grid steps when possible
        # so the "parallel" axis shards across v7x's two TensorCores.
        batch_tile = max(8, min(128, _round_up(_round_up(B, 8) // 2, 8)))

    f_pad = _round_up(f_total, 128)          # lane-dense conv output channels
    c_pad = _round_up(C, 128)                # lane-dense logits slab
    t_pad = _round_up(L, 8)                  # sublane-aligned conv output length
    l_pad = t_pad + k_max - 1                # zero-pad time so every branch has t_pad outs
    b_pad = _round_up(B, batch_tile)
    k_e = k_max * E                          # im2col contraction depth (=128 here)

    # --- fused conv weight / bias: every branch zero-padded to k_max taps,
    #     output channels concatenated and padded to f_pad ----------------------
    w_fused = jnp.zeros((k_max, E, f_pad), jnp.float32)
    b_fused = jnp.zeros((f_pad,), jnp.float32)
    valid_len = []
    off = 0
    for w, b, k, F in zip(conv_weights, conv_biases, filter_sizes, num_filters):
        w_fused = w_fused.at[:k, :, off:off + F].set(w)
        b_fused = b_fused.at[off:off + F].set(b)
        valid_len += [L - k + 1] * F          # valid conv length for this branch
        off += F
    valid_len += [t_pad] * (f_pad - f_total)  # padded channels: all-zero anyway
    valid_len = jnp.array(valid_len, jnp.int32)

    w_fused = w_fused.reshape(k_e, f_pad).astype(jnp.bfloat16)
    b_fused = b_fused.reshape(1, f_pad)

    # time-validity mask applied before the max-pool
    mask = jnp.where(jnp.arange(t_pad)[:, None] < valid_len[None, :],
                     0.0, -jnp.inf).astype(jnp.float32)

    # --- classifier, zero-padded to a lane-dense [f_pad, c_pad] slab -----------
    fcw_p = jnp.zeros((f_pad, c_pad), jnp.float32).at[:f_total, :C].set(fc_w)
    fcw_p = fcw_p.astype(jnp.bfloat16)
    fcb_p = jnp.zeros((1, c_pad), jnp.float32).at[0, :C].set(fc_b)

    # --- activations: wrapper-side im2col -> lane-dense [b_pad, t_pad, k_max*E]
    #     bf16 operand (no in-kernel slicing/concat; minor dim is 128 lanes) ----
    x_p = jnp.pad(x_embed, ((0, b_pad - B), (0, l_pad - L), (0, 0)))
    xs = jnp.concatenate([x_p[:, dk:dk + t_pad, :] for dk in range(k_max)],
                         axis=-1).astype(jnp.bfloat16)      # [b_pad, t_pad, k_e]

    grid = (b_pad // batch_tile,)

    # --- explicit VMEM footprint (drives vmem_limit_bytes) ---------------------
    footprint = (2 * batch_tile * t_pad * k_e * 2          # x tile, double-buffered bf16
                 + 2 * batch_tile * c_pad * 4              # out tile, double-buffered f32
                 + 2 * (k_e * f_pad * 2 + f_pad * 4        # resident conv W / bias
                        + t_pad * f_pad * 4                # mask
                        + f_pad * c_pad * 2 + c_pad * 4)   # fc W / bias
                 + batch_tile * t_pad * f_pad * 4)         # in-kernel f32 conv acc

    # --- advisory cost estimate for the XLA scheduler ---------------------------
    flops = 2 * b_pad * t_pad * k_e * f_pad + 2 * b_pad * f_pad * c_pad
    bytes_accessed = (b_pad * t_pad * k_e * 2 + b_pad * c_pad * 4
                      + k_e * f_pad * 2 + f_pad * c_pad * 2
                      + (f_pad + t_pad * f_pad + c_pad) * 4)
    cost = pl.CostEstimate(flops=flops, transcendentals=0,
                           bytes_accessed=bytes_accessed)

    out = pl.pallas_call(
        _kim2014_fused_kernel,
        out_shape=jax.ShapeDtypeStruct((b_pad, c_pad), jnp.float32),
        grid=grid,
        in_specs=[
            pl.BlockSpec((batch_tile, t_pad, k_e), lambda i: (i, 0, 0)),  # im2col x tile
            pl.BlockSpec((k_e, f_pad), lambda i: (0, 0)),                 # fused conv W (resident)
            pl.BlockSpec((1, f_pad), lambda i: (0, 0)),                   # fused conv b
            pl.BlockSpec((t_pad, f_pad), lambda i: (0, 0)),               # validity mask
            pl.BlockSpec((f_pad, c_pad), lambda i: (0, 0)),               # fc W (resident)
            pl.BlockSpec((1, c_pad), lambda i: (0, 0)),                   # fc b
        ],
        out_specs=pl.BlockSpec((batch_tile, c_pad), lambda i: (i, 0)),
        compiler_params=pltpu.CompilerParams(
            dimension_semantics=("parallel",),       # megacore shard on v7x
            vmem_limit_bytes=_vmem_limit_bytes(footprint)),
        cost_estimate=cost,
    )(xs, w_fused, b_fused, mask, fcw_p, fcb_p)

    return out[:B, :C]


# ---------------------------------------------------------------------------
# Pure-JAX reference (mirrors the PyTorch forward).  mimic_bf16=True rounds the
# matmul operands to bf16 exactly like the kernel, for a tight numerical check.
# ---------------------------------------------------------------------------
def reference_forward(x_embed, conv_weights, conv_biases, fc_w, fc_b,
                      *, mimic_bf16=False):
    rnd = ((lambda a: a.astype(jnp.bfloat16).astype(jnp.float32))
           if mimic_bf16 else (lambda a: a))
    x = rnd(x_embed)
    pooled = []
    for w, b in zip(conv_weights, conv_biases):
        w = rnd(w)
        k = w.shape[0]
        T = x.shape[1] - k + 1
        acc = sum(jnp.einsum('bte,ef->btf', x[:, dk:dk + T, :], w[dk],
                             precision=jax.lax.Precision.HIGHEST)
                  for dk in range(k))
        acc = jax.nn.relu(acc + b[None, None, :])
        pooled.append(jnp.max(acc, axis=1))
    feats = rnd(jnp.concatenate(pooled, axis=1))
    return (jnp.dot(feats, rnd(fc_w), precision=jax.lax.Precision.HIGHEST)
            + fc_b[None, :])


# ---------------------------------------------------------------------------
# Main
# ---------------------------------------------------------------------------
if __name__ == "__main__":
    # Small, forward-consistent shapes (batch sized to exercise the batch grid:
    # auto batch_tile -> 16, grid=(2,), keeping both v7x TensorCores busy).
    B, L = 32, 16                # batch, padded sequence length
    vocab_size = 50
    embedding_size = 32
    filter_sizes = (2, 3, 4)
    num_filters = (8, 8, 8)
    num_classes = 4

    key = jax.random.PRNGKey(0)
    k_tok, k_emb, k_fc_w, k_fc_b, *k_conv = jax.random.split(
        key, 5 + 2 * len(filter_sizes))

    # deterministic synthetic parameters
    embedding = 0.1 * jax.random.normal(k_emb, (vocab_size, embedding_size),
                                        jnp.float32)
    embedding = embedding.at[0].set(0.0)     # padding_idx=0

    conv_weights, conv_biases = [], []
    for i, (k, F) in enumerate(zip(filter_sizes, num_filters)):
        kw, kb = k_conv[2 * i], k_conv[2 * i + 1]
        # stored as [k, E, F] (transpose of PyTorch's [F, E, k]); synthetic init
        conv_weights.append(
            0.1 * jax.random.normal(kw, (k, embedding_size, F), jnp.float32))
        conv_biases.append(0.05 * jax.random.normal(kb, (F,), jnp.float32))

    total_filters = sum(num_filters)
    fc_w = 0.1 * jax.random.normal(k_fc_w, (total_filters, num_classes),
                                   jnp.float32)
    fc_b = 0.05 * jax.random.normal(k_fc_b, (num_classes,), jnp.float32)

    # input token ids (some padding zeros)
    tokens = jax.random.randint(k_tok, (B, L), 0, vocab_size, dtype=jnp.int32)
    tokens = tokens.at[:, -3:].set(0)

    # glue: embedding gather in plain JAX (float(), as in the PyTorch forward)
    x_embed = embedding[tokens].astype(jnp.float32)   # [B, L, E]

    logits = kim2014_forward(x_embed, conv_weights, conv_biases, fc_w, fc_b,
                             filter_sizes, num_filters)
    logits = jax.block_until_ready(logits)
    assert logits.shape == (B, num_classes)

    # Tight check vs a reference that mimics the kernel's bf16 operand rounding
    ref_bf16 = reference_forward(x_embed, conv_weights, conv_biases, fc_w, fc_b,
                                 mimic_bf16=True)
    assert jnp.allclose(logits, ref_bf16, atol=1e-4, rtol=1e-4), (logits, ref_bf16)

    # Loose check vs the pure-f32 PyTorch-semantics reference (bf16 operand error)
    ref_f32 = reference_forward(x_embed, conv_weights, conv_biases, fc_w, fc_b,
                                mimic_bf16=False)
    assert jnp.allclose(logits, ref_f32, atol=2e-2, rtol=2e-2), (logits, ref_f32)

    print("KERNEL_OK")
</pallas_src>

<mosaic_0001>
module attributes {stable_mosaic.version = 11 : i64} {
  func.func @_kim2014_fused_kernel(%arg0: i32, %arg1: memref<16x16x128xbf16, #tpu.memory_space<vmem>>, %arg2: memref<128x128xbf16, #tpu.memory_space<vmem>>, %arg3: memref<1x128xf32, #tpu.memory_space<vmem>>, %arg4: memref<16x128xf32, #tpu.memory_space<vmem>>, %arg5: memref<128x128xbf16, #tpu.memory_space<vmem>>, %arg6: memref<1x128xf32, #tpu.memory_space<vmem>>, %arg7: memref<16x128xf32, #tpu.memory_space<vmem>>) attributes {dimension_semantics = [#tpu.dimension_semantics<parallel>], iteration_bounds = array<i64: 2>, scalar_prefetch = 0 : i64, scratch_operands = 0 : i64, tpu.core_type = #tpu.core_type<tc>, window_params = [{transform_indices = @transform_0, window_bounds = array<i64: 16, 16, 128>}, {pipeline_mode = #tpu.pipeline_mode<synchronous>, transform_indices = @transform_1, window_bounds = array<i64: 128, 128>}, {pipeline_mode = #tpu.pipeline_mode<synchronous>, transform_indices = @transform_2, window_bounds = array<i64: 1, 128>}, {pipeline_mode = #tpu.pipeline_mode<synchronous>, transform_indices = @transform_3, window_bounds = array<i64: 16, 128>}, {pipeline_mode = #tpu.pipeline_mode<synchronous>, transform_indices = @transform_4, window_bounds = array<i64: 128, 128>}, {pipeline_mode = #tpu.pipeline_mode<synchronous>, transform_indices = @transform_5, window_bounds = array<i64: 1, 128>}, {transform_indices = @transform_6, window_bounds = array<i64: 16, 128>}]} {
    %c0 = arith.constant 0 : index
    %c0_0 = arith.constant 0 : index
    %c0_1 = arith.constant 0 : index
    %0 = vector.load %arg1[%c0, %c0_0, %c0_1] : memref<16x16x128xbf16, #tpu.memory_space<vmem>>, vector<16x16x128xbf16>
    %c0_2 = arith.constant 0 : index
    %c0_3 = arith.constant 0 : index
    %1 = vector.load %arg2[%c0_2, %c0_3] : memref<128x128xbf16, #tpu.memory_space<vmem>>, vector<128x128xbf16>
    %cst = arith.constant dense<0.000000e+00> : vector<16x16x128xf32>
    %2 = tpu.matmul %0, %1, %cst {dimension_numbers = #tpu.dot_dimension_numbers<[2], [0], [0, 1], [1], [0, 0, 0, 1, 1, 1], [], []>} : vector<16x16x128xbf16>, vector<128x128xbf16>, vector<16x16x128xf32> -> vector<16x16x128xf32>
    %c0_4 = arith.constant 0 : index
    %c0_5 = arith.constant 0 : index
    %3 = vector.load %arg4[%c0_4, %c0_5] : memref<16x128xf32, #tpu.memory_space<vmem>>, vector<16x128xf32>
    %4 = vector.shape_cast %3 : vector<16x128xf32> to vector<1x16x128xf32>
    %5 = vector.broadcast %4 : vector<1x16x128xf32> to vector<16x16x128xf32>
    %6 = arith.addf %2, %5 : vector<16x16x128xf32>
    %cst_6 = arith.constant dense<0xFF800000> : vector<16x128xf32>
    %7 = vector.multi_reduction <maximumf>, %6, %cst_6 [1] : vector<16x16x128xf32> to vector<16x128xf32>
    %c0_7 = arith.constant 0 : index
    %c0_8 = arith.constant 0 : index
    %8 = vector.load %arg3[%c0_7, %c0_8] : memref<1x128xf32, #tpu.memory_space<vmem>>, vector<1x128xf32>
    %9 = vector.broadcast %8 : vector<1x128xf32> to vector<16x128xf32>
    %10 = arith.addf %7, %9 : vector<16x128xf32>
    %cst_9 = arith.constant 0.000000e+00 : f32
    %11 = vector.broadcast %cst_9 : f32 to vector<16x128xf32>
    %12 = arith.maximumf %10, %11 : vector<16x128xf32>
    %13 = arith.truncf %12 : vector<16x128xf32> to vector<16x128xbf16>
    %c0_10 = arith.constant 0 : index
    %c0_11 = arith.constant 0 : index
    %14 = vector.load %arg5[%c0_10, %c0_11] : memref<128x128xbf16, #tpu.memory_space<vmem>>, vector<128x128xbf16>
    %cst_12 = arith.constant dense<0.000000e+00> : vector<16x128xf32>
    %15 = tpu.matmul %13, %14, %cst_12 {dimension_numbers = #tpu.dot_dimension_numbers<[1], [0], [0], [1], [0, 0, 1, 1], [], []>} : vector<16x128xbf16>, vector<128x128xbf16>, vector<16x128xf32> -> vector<16x128xf32>
    %c0_13 = arith.constant 0 : index
    %c0_14 = arith.constant 0 : index
    %16 = vector.load %arg6[%c0_13, %c0_14] : memref<1x128xf32, #tpu.memory_space<vmem>>, vector<1x128xf32>
    %17 = vector.broadcast %16 : vector<1x128xf32> to vector<16x128xf32>
    %18 = arith.addf %15, %17 : vector<16x128xf32>
    %c0_15 = arith.constant 0 : index
    %c0_16 = arith.constant 0 : index
    %19 = vector.load %arg7[%c0_15, %c0_16] : memref<16x128xf32, #tpu.memory_space<vmem>>, vector<16x128xf32>
    tpu.vector_store %arg7[%c0_15, %c0_16], %18 {strides = array<i32>} : memref<16x128xf32, #tpu.memory_space<vmem>>, vector<16x128xf32>,
    return
  }
  func.func @transform_0(%arg0: i32) -> (i32, i32, i32) {
    %c0_i32 = arith.constant 0 : i32
    %c0_i32_0 = arith.constant 0 : i32
    %c0_i32_1 = arith.constant 0 : i32
    return %arg0, %c0_i32, %c0_i32_0 : i32, i32, i32
  }
  func.func @transform_1(%arg0: i32) -> (i32, i32) {
    %c0_i32 = arith.constant 0 : i32
    %c0_i32_0 = arith.constant 0 : i32
    %c0_i32_1 = arith.constant 0 : i32
    return %c0_i32, %c0_i32_0 : i32, i32
  }
  func.func @transform_2(%arg0: i32) -> (i32, i32) {
    %c0_i32 = arith.constant 0 : i32
    %c0_i32_0 = arith.constant 0 : i32
    %c0_i32_1 = arith.constant 0 : i32
    return %c0_i32, %c0_i32_0 : i32, i32
  }
  func.func @transform_3(%arg0: i32) -> (i32, i32) {
    %c0_i32 = arith.constant 0 : i32
    %c0_i32_0 = arith.constant 0 : i32
    %c0_i32_1 = arith.constant 0 : i32
    return %c0_i32, %c0_i32_0 : i32, i32
  }
  func.func @transform_4(%arg0: i32) -> (i32, i32) {
    %c0_i32 = arith.constant 0 : i32
    %c0_i32_0 = arith.constant 0 : i32
    %c0_i32_1 = arith.constant 0 : i32
    return %c0_i32, %c0_i32_0 : i32, i32
  }
  func.func @transform_5(%arg0: i32) -> (i32, i32) {
    %c0_i32 = arith.constant 0 : i32
    %c0_i32_0 = arith.constant 0 : i32
    %c0_i32_1 = arith.constant 0 : i32
    return %c0_i32, %c0_i32_0 : i32, i32
  }
  func.func @transform_6(%arg0: i32) -> (i32, i32) {
    %c0_i32 = arith.constant 0 : i32
    %c0_i32_0 = arith.constant 0 : i32
    return %arg0, %c0_i32 : i32, i32
  }
}

</mosaic_0001>

<llo_original>
// kernel: tpu_custom_call.1
$region0: #{tpu_custom_call.1}
  #allocation0 [shape = 'u32[]', space=smem, size = 0x4, offset = 0x4, fixed_abs, tag = 'smem constant byte address 0x4 - core index']
  #allocation1 [shape = 'u32[144,128]{1,0:T(1,128)}', space=vmem, size = 0x12000, scoped, tag = 'internal scratch']
  %s0 = inlined_call_operand.hbm [shape: bf16[32,16,128], index: 0, kind: input, shape index: {}]
  %s1 = inlined_call_operand.hbm [shape: bf16[128,128], index: 1, kind: input, shape index: {}]
  %s2 = inlined_call_operand.vmem [shape: f32[1,128], index: 2, kind: input, shape index: {}]
  %s3 = inlined_call_operand.hbm [shape: f32[16,128], index: 3, kind: input, shape index: {}]
  %s4 = inlined_call_operand.hbm [shape: bf16[128,128], index: 4, kind: input, shape index: {}]
  %s5 = inlined_call_operand.vmem [shape: f32[1,128], index: 5, kind: input, shape index: {}]
  %s6 = inlined_call_operand.hbm [shape: f32[32,128], index: 6, kind: output, shape index: {}]
  %s7 = sld [smem:[#allocation0]]
  $region73: #{tpu_custom_call.1} parent=0
    _
  %s9 = ssub.s32 1, %s7
  %s10 = scalar_select 0, %s9, %s7
  $region1: #{tpu_custom_call.1} parent=0
    #allocation2 [shape = 'u8[131072]{0}', space=vmem, size = 0x20000, scoped, tag = 'input window, operand 0']
    #allocation3 [shape = 's32[2]{0}', space=sflag, size = 0x8, scoped, tag = 'scoped memory for tpu_custom_call.1']
    #allocation4 [shape = 's32[2]{0}', space=sflag, size = 0x8, scoped, tag = 'scoped memory for tpu_custom_call.1']
    #allocation5 [shape = 'u8[32768]{0}', space=vmem, size = 0x8000, scoped, tag = 'input window, operand 1, single buffered']
    #allocation6 [shape = 's32[1]{0}', space=sflag, size = 0x4, scoped, tag = 'scoped memory for tpu_custom_call.1']
    #allocation7 [shape = 'u8[8192]{0}', space=vmem, size = 0x2000, scoped, tag = 'input window, operand 3, single buffered']
    #allocation8 [shape = 'u8[32768]{0}', space=vmem, size = 0x8000, scoped, tag = 'input window, operand 4, single buffered']
    #allocation9 [shape = 's32[1]{0}', space=sflag, size = 0x4, scoped, tag = 'scoped memory for tpu_custom_call.1']
    #allocation10 [shape = 'u8[16384]{0}', space=vmem, size = 0x4000, scoped, tag = 'output window, operand 0']
    %11 = vsyncpa [#allocation3], 0
    %s12 = scalar_lea.sflag [#allocation3], 1
    %13 = vsyncpa %s12, 0
    %14 = vsyncpa [#allocation6], 0
    %15 = vsyncpa [#allocation9], 0
    %16 = vsyncpa [#allocation4], 0
    %s17 = scalar_lea.sflag [#allocation4], 1
    %18 = vsyncpa %s17, 0
    loop: start=0, step=1, limit=4
    $region2: #{tpu_custom_call.1} parent=1 // loop_pre_header
      _
    $region3: #{tpu_custom_call.1} parent=1 // loop_header
      %s20 = sphi 0, %s24
      %p21 = scmp.ge.s32.totalorder %s20, 4
      %s30 = sphi 0, %s32
      %s33 = sphi 0, %s30
      %s34 = sphi 0, %s33
      %s50 = sphi 0, %s34
      %s54 = sphi 0, %s54
      %s56 = sphi 0, %s54
      %s57 = sphi 0, %s56
      %s71 = sphi 0, %s57
      %s75 = sphi 0, %s75
      %s77 = sphi 0, %s75
      %s78 = sphi 0, %s77
      %s92 = sphi 0, %s78
      %s96 = sphi 0, %s96
      %s98 = sphi 0, %s96
      %s99 = sphi 0, %s98
      %s113 = sphi 0, %s99
      %s117 = sphi 0, %s117
      %s119 = sphi 0, %s117
      %s120 = sphi 0, %s119
      %s134 = sphi 0, %s120
      %s138 = sphi 0, %s138
      %s140 = sphi 0, %s138
      %s141 = sphi 0, %s140
      %s155 = sphi 0, %s141
      %s161 = sphi 0, %s163
      %s164 = sphi 0, %s161
      %s165 = sphi 0, %s164
      %s181 = sphi 0, %s165
    $region4: #{tpu_custom_call.1} parent=1 // loop_header_branch
      %23 = sbr.rel (%p21) target = $region8
    $region5: #{tpu_custom_call.1} parent=1 // loop_body
      %s25 = ssub.s32 %s20, 1
      %s26 = ssub.s32 %s20, 2
      %s27 = sadd.s32 %s20, 1
      %s28 = ssub.s32 %s20, %s27
      %p29 = scmp.eq.s32.totalorder %s28, 0
      %s31 = sadd.s32 %s30, 1
      %s32 = scalar_select %p29, %s30, %s31
      %p35 = pneg %p29
      %p36 = scmp.eq.s32.totalorder %s20, 1
      %p37 = por %p35, %p36
      %p38 = scmp.ne.s32.totalorder %s30, %s33
      %p39 = scmp.eq.s32.totalorder %s20, 0
      %p40 = por %p38, %p39
      %p41 = scmp.ne.s32.totalorder %s30, %s33
      %p42 = scmp.eq.s32.totalorder %s25, 1
      %p43 = por %p41, %p42
      %p44 = scmp.ne.s32.totalorder %s33, %s34
      %p45 = scmp.eq.s32.totalorder %s25, 0
      %p46 = por %p44, %p45
      %p47 = scmp.ne.s32.totalorder %s33, %s34
      %p48 = scmp.eq.s32.totalorder %s26, 1
      %p49 = por %p47, %p48
      %p51 = scmp.ne.s32.totalorder %s34, %s50
      %p52 = scmp.eq.s32.totalorder %s26, 0
      %p53 = por %p51, %p52
      %s55 = sadd.s32 %s54, 1
      %p58 = scmp.eq.s32.totalorder %s20, 1
      %p59 = scmp.ne.s32.totalorder %s54, %s56
      %p60 = scmp.eq.s32.totalorder %s20, 0
      %p61 = por %p59, %p60
      %p62 = scmp.ne.s32.totalorder %s54, %s56
      %p63 = scmp.eq.s32.totalorder %s25, 1
      %p64 = por %p62, %p63
      %p65 = scmp.ne.s32.totalorder %s56, %s57
      %p66 = scmp.eq.s32.totalorder %s25, 0
      %p67 = por %p65, %p66
      %p68 = scmp.ne.s32.totalorder %s56, %s57
      %p69 = scmp.eq.s32.totalorder %s26, 1
      %p70 = por %p68, %p69
      %p72 = scmp.ne.s32.totalorder %s57, %s71
      %p73 = scmp.eq.s32.totalorder %s26, 0
      %p74 = por %p72, %p73
      %s76 = sadd.s32 %s75, 1
      %p79 = scmp.eq.s32.totalorder %s20, 1
      %p80 = scmp.ne.s32.totalorder %s75, %s77
      %p81 = scmp.eq.s32.totalorder %s20, 0
      %p82 = por %p80, %p81
      %p83 = scmp.ne.s32.totalorder %s75, %s77
      %p84 = scmp.eq.s32.totalorder %s25, 1
      %p85 = por %p83, %p84
      %p86 = scmp.ne.s32.totalorder %s77, %s78
      %p87 = scmp.eq.s32.totalorder %s25, 0
      %p88 = por %p86, %p87
      %p89 = scmp.ne.s32.totalorder %s77, %s78
      %p90 = scmp.eq.s32.totalorder %s26, 1
      %p91 = por %p89, %p90
      %p93 = scmp.ne.s32.totalorder %s78, %s92
      %p94 = scmp.eq.s32.totalorder %s26, 0
      %p95 = por %p93, %p94
      %s97 = sadd.s32 %s96, 1
      %p100 = scmp.eq.s32.totalorder %s20, 1
      %p101 = scmp.ne.s32.totalorder %s96, %s98
      %p102 = scmp.eq.s32.totalorder %s20, 0
      %p103 = por %p101, %p102
      %p104 = scmp.ne.s32.totalorder %s96, %s98
      %p105 = scmp.eq.s32.totalorder %s25, 1
      %p106 = por %p104, %p105
      %p107 = scmp.ne.s32.totalorder %s98, %s99
      %p108 = scmp.eq.s32.totalorder %s25, 0
      %p109 = por %p107, %p108
      %p110 = scmp.ne.s32.totalorder %s98, %s99
      %p111 = scmp.eq.s32.totalorder %s26, 1
      %p112 = por %p110, %p111
      %p114 = scmp.ne.s32.totalorder %s99, %s113
      %p115 = scmp.eq.s32.totalorder %s26, 0
      %p116 = por %p114, %p115
      %s118 = sadd.s32 %s117, 1
      %p121 = scmp.eq.s32.totalorder %s20, 1
      %p122 = scmp.ne.s32.totalorder %s117, %s119
      %p123 = scmp.eq.s32.totalorder %s20, 0
      %p124 = por %p122, %p123
      %p125 = scmp.ne.s32.totalorder %s117, %s119
      %p126 = scmp.eq.s32.totalorder %s25, 1
      %p127 = por %p125, %p126
      %p128 = scmp.ne.s32.totalorder %s119, %s120
      %p129 = scmp.eq.s32.totalorder %s25, 0
      %p130 = por %p128, %p129
      %p131 = scmp.ne.s32.totalorder %s119, %s120
      %p132 = scmp.eq.s32.totalorder %s26, 1
      %p133 = por %p131, %p132
      %p135 = scmp.ne.s32.totalorder %s120, %s134
      %p136 = scmp.eq.s32.totalorder %s26, 0
      %p137 = por %p135, %p136
      %s139 = sadd.s32 %s138, 1
      %p142 = scmp.eq.s32.totalorder %s20, 1
      %p143 = scmp.ne.s32.totalorder %s138, %s140
      %p144 = scmp.eq.s32.totalorder %s20, 0
      %p145 = por %p143, %p144
      %p146 = scmp.ne.s32.totalorder %s138, %s140
      %p147 = scmp.eq.s32.totalorder %s25, 1
      %p148 = por %p146, %p147
      %p149 = scmp.ne.s32.totalorder %s140, %s141
      %p150 = scmp.eq.s32.totalorder %s25, 0
      %p151 = por %p149, %p150
      %p152 = scmp.ne.s32.totalorder %s140, %s141
      %p153 = scmp.eq.s32.totalorder %s26, 1
      %p154 = por %p152, %p153
      %p156 = scmp.ne.s32.totalorder %s141, %s155
      %p157 = scmp.eq.s32.totalorder %s26, 0
      %p158 = por %p156, %p157
      %s159 = ssub.s32 %s20, %s27
      %p160 = scmp.eq.s32.totalorder %s159, 0
      %s162 = sadd.s32 %s161, 1
      %s163 = scalar_select %p160, %s161, %s162
      %p166 = pneg %p160
      %p167 = scmp.eq.s32.totalorder %s20, 1
      %p168 = por %p166, %p167
      %p169 = scmp.ne.s32.totalorder %s161, %s164
      %p170 = scmp.eq.s32.totalorder %s20, 0
      %p171 = por %p169, %p170
      %p172 = scmp.ne.s32.totalorder %s161, %s164
      %p173 = scmp.eq.s32.totalorder %s25, 1
      %p174 = por %p172, %p173
      %p175 = scmp.ne.s32.totalorder %s164, %s165
      %p176 = scmp.eq.s32.totalorder %s25, 0
      %p177 = por %p175, %p176
      %p178 = scmp.ne.s32.totalorder %s164, %s165
      %p179 = scmp.eq.s32.totalorder %s26, 1
      %p180 = por %p178, %p179
      %p182 = scmp.ne.s32.totalorder %s165, %s181
      %p183 = scmp.eq.s32.totalorder %s26, 0
      %p184 = por %p182, %p183
      %p185 = scmp.le.s32.totalorder 1, %s20
      %p186 = scmp.lt.s32.totalorder %s20, 3
      %p187 = pnand %p185, %p186
      %p188 = pneg %p187
      // Predicated region
      $region9: #{tpu_custom_call.1} parent=5 // pred_check
        _
      $region10: #{tpu_custom_call.1} parent=5 // pred_check_branch
        %190 = sbr.rel (%p187) target = $region12
      $region11: #{tpu_custom_call.1} parent=5 // pred_region
        %s191 = ssub.s32 %s20, 1
        // Predicated region
        $region13: #{tpu_custom_call.1} parent=11 // pred_check
          %p192 = pneg %p67
        $region14: #{tpu_custom_call.1} parent=11 // pred_check_branch
          %194 = sbr.rel (%p192) target = $region16
        $region15: #{tpu_custom_call.1} parent=11 // pred_region
          %s196 = ssub.s32 1024, 1024
          %197 = vsyncadd [#allocation6], %s196
          %s198 = sshll.u32 [#allocation5], 4
          %s199 = int_to_ptr.vmem [resolvable:$true] %s198
          %204 = dma.hbm_to_vmem [thread:$0]  %s1, 1024, %s199, [#allocation6], 64, 64, 4
        $region16: #{tpu_custom_call.1} parent=11 // pred_fallthru
          _
        // Predicated region
        $region17: #{tpu_custom_call.1} parent=11 // pred_check
          %p205 = pneg %p88
        $region18: #{tpu_custom_call.1} parent=11 // pred_check_branch
          %207 = sbr.rel (%p205) target = $region20
        $region19: #{tpu_custom_call.1} parent=11 // pred_region
          _
        $region20: #{tpu_custom_call.1} parent=11 // pred_fallthru
          _
        // Predicated region
        $region21: #{tpu_custom_call.1} parent=11 // pred_check
          %p208 = pneg %p109
        $region22: #{tpu_custom_call.1} parent=11 // pred_check_branch
          %210 = sbr.rel (%p208) target = $region24
        $region23: #{tpu_custom_call.1} parent=11 // pred_region
          %s212 = ssub.s32 256, 256
          %213 = vsyncadd [#allocation6], %s212
          %s214 = sshll.u32 [#allocation7], 4
          %s215 = int_to_ptr.vmem [resolvable:$true] %s214
          %220 = dma.hbm_to_vmem [thread:$0]  %s3, 256, %s215, [#allocation6], 128, 128, 8
        $region24: #{tpu_custom_call.1} parent=11 // pred_fallthru
          _
        // Predicated region
        $region25: #{tpu_custom_call.1} parent=11 // pred_check
          %p221 = pneg %p130
        $region26: #{tpu_custom_call.1} parent=11 // pred_check_branch
          %223 = sbr.rel (%p221) target = $region28
        $region27: #{tpu_custom_call.1} parent=11 // pred_region
          %s225 = ssub.s32 1024, 1024
          %226 = vsyncadd [#allocation9], %s225
          %s227 = sshll.u32 [#allocation8], 4
          %s228 = int_to_ptr.vmem [resolvable:$true] %s227
          %233 = dma.hbm_to_vmem [thread:$0]  %s4, 1024, %s228, [#allocation9], 64, 64, 4
        $region28: #{tpu_custom_call.1} parent=11 // pred_fallthru
          _
        // Predicated region
        $region29: #{tpu_custom_call.1} parent=11 // pred_check
          %p234 = pneg %p151
        $region30: #{tpu_custom_call.1} parent=11 // pred_check_branch
          %236 = sbr.rel (%p234) target = $region32
        $region31: #{tpu_custom_call.1} parent=11 // pred_region
          _
        $region32: #{tpu_custom_call.1} parent=11 // pred_fallthru
          _
      $region12: #{tpu_custom_call.1} parent=5 // pred_fallthru
        _
      %p237 = scmp.lt.s32.totalorder %s20, 2
      // Predicated region
      $region33: #{tpu_custom_call.1} parent=5 // pred_check
        %p238 = pneg %p237
      $region34: #{tpu_custom_call.1} parent=5 // pred_check_branch
        %240 = sbr.rel (%p238) target = $region36
      $region35: #{tpu_custom_call.1} parent=5 // pred_region
        // Predicated region
        $region37: #{tpu_custom_call.1} parent=35 // pred_check
          %p241 = pneg %p40
        $region38: #{tpu_custom_call.1} parent=35 // pred_check_branch
          %243 = sbr.rel (%p241) target = $region40
        $region39: #{tpu_custom_call.1} parent=35 // pred_region
          %s244 = sand.u32 %s30, 1
          %s245 = scalar_lea.sflag [#allocation3], %s244
          %s246 = sand.u32 %s30, 1
          %s247 = smul.addr %s246, 128
          %s248 = scalar_lea.vmem [#allocation2], %s247
          %s249 = smul.u32 16, %s20
          %s251 = ssub.s32 2048, 2048
          %252 = vsyncadd %s245, %s251
          %s253 = smul.addr %s249, 2
          %s254 = smul.addr %s253, 64
          %s255 = scalar_lea.hbm %s0, %s254
          %s256 = sshll.u32 %s248, 4
          %s257 = int_to_ptr.vmem [resolvable:$true] %s256
          %262 = dma.hbm_to_vmem [thread:$0]  %s255, 2048, %s257, %s245, 64, 64, 4
        $region40: #{tpu_custom_call.1} parent=35 // pred_fallthru
          _
      $region36: #{tpu_custom_call.1} parent=5 // pred_fallthru
        _
      %p263 = scmp.le.s32.totalorder 1, %s20
      %p264 = scmp.lt.s32.totalorder %s20, 3
      %p265 = pnand %p263, %p264
      %p266 = pneg %p265
      // Predicated region
      $region41: #{tpu_custom_call.1} parent=5 // pred_check
        _
      $region42: #{tpu_custom_call.1} parent=5 // pred_check_branch
        %268 = sbr.rel (%p265) target = $region44
      $region43: #{tpu_custom_call.1} parent=5 // pred_region
        %s269 = ssub.s32 %s20, 1
        %s270 = sand.u32 %s33, 1
        %s271 = scalar_lea.sflag [#allocation3], %s270
        %s272 = sand.u32 %s33, 1
        %s273 = smul.addr %s272, 128
        %s274 = scalar_lea.vmem [#allocation2], %s273
        // Predicated region
        $region45: #{tpu_custom_call.1} parent=43 // pred_check
          %p275 = pneg %p46
        $region46: #{tpu_custom_call.1} parent=43 // pred_check_branch
          %277 = sbr.rel (%p275) target = $region48
        $region47: #{tpu_custom_call.1} parent=43 // pred_region
          %278 = dma.done %s271, 2048
        $region48: #{tpu_custom_call.1} parent=43 // pred_fallthru
          _
        // Predicated region
        $region49: #{tpu_custom_call.1} parent=43 // pred_check
          %p279 = pneg %p67
        $region50: #{tpu_custom_call.1} parent=43 // pred_check_branch
          %281 = sbr.rel (%p279) target = $region52
        $region51: #{tpu_custom_call.1} parent=43 // pred_region
          %282 = dma.done [#allocation6], 1024
        $region52: #{tpu_custom_call.1} parent=43 // pred_fallthru
          _
        // Predicated region
        $region53: #{tpu_custom_call.1} parent=43 // pred_check
          %p283 = pneg %p109
        $region54: #{tpu_custom_call.1} parent=43 // pred_check_branch
          %285 = sbr.rel (%p283) target = $region56
        $region55: #{tpu_custom_call.1} parent=43 // pred_region
          %286 = dma.done [#allocation6], 256
        $region56: #{tpu_custom_call.1} parent=43 // pred_fallthru
          _
        // Predicated region
        $region57: #{tpu_custom_call.1} parent=43 // pred_check
          %p287 = pneg %p130
        $region58: #{tpu_custom_call.1} parent=43 // pred_check_branch
          %289 = sbr.rel (%p287) target = $region60
        $region59: #{tpu_custom_call.1} parent=43 // pred_region
          %290 = dma.done [#allocation9], 1024
        $region60: #{tpu_custom_call.1} parent=43 // pred_fallthru
          _
        %s291 = sand.u32 %s33, 1
        %s292 = scalar_lea.sflag [#allocation3], %s291
        %s293 = sand.u32 %s33, 1
        %s294 = smul.addr %s293, 128
        %s295 = scalar_lea.vmem [#allocation2], %s294
        %p296 = pneg %p46
        %p297 = pneg %p43
        %p298 = pneg %p67
        %p299 = pneg %p64
        %p300 = pneg %p88
        %p301 = pneg %p85
        %p302 = pneg %p109
        %p303 = pneg %p106
        %p304 = pneg %p130
        %p305 = pneg %p127
        %p306 = pneg %p151
        %p307 = pneg %p148
        %p308 = pneg %p177
        %p309 = pneg %p174
        %s310 = sand.u32 %s164, 1
        %s311 = scalar_lea.sflag [#allocation4], %s310
        %s312 = sand.u32 %s164, 1
        %s313 = smul.addr %s312, 16
        %s314 = scalar_lea.vmem [#allocation10], %s313
        %s315 = smul.u32 16, %s25
        %s316 = smul.u32 2, %s25
        %v318 = vld [vmem:[%s274] sm:$0xf]
        %v319 = vld [vmem:[%s274 + $0x4] sm:$0xf]
        %v320 = vld [vmem:[%s274 + $0x8] sm:$0xf]
        %v321 = vld [vmem:[%s274 + $0xc] sm:$0xf]
        %v322 = vld [vmem:[%s274 + $0x10] sm:$0xf]
        %v323 = vld [vmem:[%s274 + $0x14] sm:$0xf]
        %v324 = vld [vmem:[%s274 + $0x18] sm:$0xf]
        %v325 = vld [vmem:[%s274 + $0x1c] sm:$0xf]
        %v326 = vld [vmem:[%s274 + $0x20] sm:$0xf]
        %v327 = vld [vmem:[%s274 + $0x24] sm:$0xf]
        %v328 = vld [vmem:[%s274 + $0x28] sm:$0xf]
        %v329 = vld [vmem:[%s274 + $0x2c] sm:$0xf]
        %v330 = vld [vmem:[%s274 + $0x30] sm:$0xf]
        %v331 = vld [vmem:[%s274 + $0x34] sm:$0xf]
        %v332 = vld [vmem:[%s274 + $0x38] sm:$0xf]
        %v333 = vld [vmem:[%s274 + $0x3c] sm:$0xf]
        %v334 = vld [vmem:[%s274 + $0x40] sm:$0xf]
        %v335 = vld [vmem:[%s274 + $0x44] sm:$0xf]
        %v336 = vld [vmem:[%s274 + $0x48] sm:$0xf]
        %v337 = vld [vmem:[%s274 + $0x4c] sm:$0xf]
        %v338 = vld [vmem:[%s274 + $0x50] sm:$0xf]
        %v339 = vld [vmem:[%s274 + $0x54] sm:$0xf]
        %v340 = vld [vmem:[%s274 + $0x58] sm:$0xf]
        %v341 = vld [vmem:[%s274 + $0x5c] sm:$0xf]
        %v342 = vld [vmem:[%s274 + $0x60] sm:$0xf]
        %v343 = vld [vmem:[%s274 + $0x64] sm:$0xf]
        %v344 = vld [vmem:[%s274 + $0x68] sm:$0xf]
        %v345 = vld [vmem:[%s274 + $0x6c] sm:$0xf]
        %v346 = vld [vmem:[%s274 + $0x70] sm:$0xf]
        %v347 = vld [vmem:[%s274 + $0x74] sm:$0xf]
        %v348 = vld [vmem:[%s274 + $0x78] sm:$0xf]
        %v349 = vld [vmem:[%s274 + $0x7c] sm:$0xf]
        %v350 = vld [vmem:[#allocation5] sm:$0xf]
        %v351 = vld [vmem:[#allocation5 + $0x4] sm:$0xf]
        %v352 = vld [vmem:[#allocation5 + $0x8] sm:$0xf]
        %v353 = vld [vmem:[#allocation5 + $0xc] sm:$0xf]
        %v354 = vld [vmem:[#allocation5 + $0x10] sm:$0xf]
        %v355 = vld [vmem:[#allocation5 + $0x14] sm:$0xf]
        %v356 = vld [vmem:[#allocation5 + $0x18] sm:$0xf]
        %v357 = vld [vmem:[#allocation5 + $0x1c] sm:$0xf]
        %v358 = vld [vmem:[#allocation5 + $0x20] sm:$0xf]
        %v359 = vld [vmem:[#allocation5 + $0x24] sm:$0xf]
        %v360 = vld [vmem:[#allocation5 + $0x28] sm:$0xf]
        %v361 = vld [vmem:[#allocation5 + $0x2c] sm:$0xf]
        %v362 = vld [vmem:[#allocation5 + $0x30] sm:$0xf]
        %v363 = vld [vmem:[#allocation5 + $0x34] sm:$0xf]
        %v364 = vld [vmem:[#allocation5 + $0x38] sm:$0xf]
        %v365 = vld [vmem:[#allocation5 + $0x3c] sm:$0xf]
        %v366 = vld [vmem:[#allocation7] sm:$0xff]
        %v367 = vld [vmem:[#allocation7 + $0x8] sm:$0xff]
        %v400 = vunpack.c.l.b16 %v318
        %v401 = vunpack.c.l.b16 %v319
        %v402 = vunpack.c.l.b16 %v320
        %v403 = vunpack.c.l.b16 %v321
        %v404 = vunpack.c.l.b16 %v322
        %v405 = vunpack.c.l.b16 %v323
        %v406 = vunpack.c.l.b16 %v324
        %v407 = vunpack.c.l.b16 %v325
        %v408 = vunpack.c.l.b16 %v326
        %v409 = vunpack.c.l.b16 %v327
        %v410 = vunpack.c.l.b16 %v328
        %v411 = vunpack.c.l.b16 %v329
        %v412 = vunpack.c.l.b16 %v330
        %v413 = vunpack.c.l.b16 %v331
        %v414 = vunpack.c.l.b16 %v332
        %v415 = vunpack.c.l.b16 %v333
        %v416 = vunpack.c.l.b16 %v334
        %v417 = vunpack.c.l.b16 %v335
        %v418 = vunpack.c.l.b16 %v336
        %v419 = vunpack.c.l.b16 %v337
        %v420 = vunpack.c.l.b16 %v338
        %v421 = vunpack.c.l.b16 %v339
        %v422 = vunpack.c.l.b16 %v340
        %v423 = vunpack.c.l.b16 %v341
        %v424 = vunpack.c.l.b16 %v342
        %v425 = vunpack.c.l.b16 %v343
        %v426 = vunpack.c.l.b16 %v344
        %v427 = vunpack.c.l.b16 %v345
        %v428 = vunpack.c.l.b16 %v346
        %v429 = vunpack.c.l.b16 %v347
        %v430 = vunpack.c.l.b16 %v348
        %v431 = vunpack.c.l.b16 %v349
        %v432 = vpack.c.b16 %v401, %v400
        %v433 = vpack.c.b16 %v403, %v402
        %v434 = vpack.c.b16 %v405, %v404
        %v435 = vpack.c.b16 %v407, %v406
        %v436 = vpack.c.b16 %v409, %v408
        %v437 = vpack.c.b16 %v411, %v410
        %v438 = vpack.c.b16 %v413, %v412
        %v439 = vpack.c.b16 %v415, %v414
        %v440 = vpack.c.b16 %v417, %v416
        %v441 = vpack.c.b16 %v419, %v418
        %v442 = vpack.c.b16 %v421, %v420
        %v443 = vpack.c.b16 %v423, %v422
        %v444 = vpack.c.b16 %v425, %v424
        %v445 = vpack.c.b16 %v427, %v426
        %v446 = vpack.c.b16 %v429, %v428
        %v447 = vpack.c.b16 %v431, %v430
        %v480 = vunpack.c.l.b16 %v350
        %v481 = vunpack.c.l.b16 %v351
        %v482 = vunpack.c.l.b16 %v352
        %v483 = vunpack.c.l.b16 %v353
        %v484 = vunpack.c.l.b16 %v354
        %v485 = vunpack.c.l.b16 %v355
        %v486 = vunpack.c.l.b16 %v356
        %v487 = vunpack.c.l.b16 %v357
        %v488 = vunpack.c.l.b16 %v358
        %v489 = vunpack.c.l.b16 %v359
        %v490 = vunpack.c.l.b16 %v360
        %v491 = vunpack.c.l.b16 %v361
        %v492 = vunpack.c.l.b16 %v362
        %v493 = vunpack.c.l.b16 %v363
        %v494 = vunpack.c.l.b16 %v364
        %v495 = vunpack.c.l.b16 %v365
        %v496 = vpack.c.b16 %v481, %v480
        %v497 = vpack.c.b16 %v483, %v482
        %v498 = vpack.c.b16 %v485, %v484
        %v499 = vpack.c.b16 %v487, %v486
        %v500 = vpack.c.b16 %v489, %v488
        %v501 = vpack.c.b16 %v491, %v490
        %v502 = vpack.c.b16 %v493, %v492
        %v503 = vpack.c.b16 %v495, %v494
        %512 = vmatprep.subr.bf16.mxu0 0
        %513 = vmatpush1.bf16.msra.mxu0 %v503
        %514 = vmatprep.subr.bf16.mxu0 0
        %515 = vmatpush1.bf16.msra.mxu0 %v502
        %516 = vmatprep.subr.bf16.mxu0 0
        %517 = vmatpush1.bf16.msra.mxu0 %v501
        %518 = vmatprep.subr.bf16.mxu0 0
        %519 = vmatpush1.bf16.msra.mxu0 %v500
        %520 = vmatprep.subr.bf16.mxu0 0
        %521 = vmatpush1.bf16.msra.mxu0 %v499
        %522 = vmatprep.subr.bf16.mxu0 0
        %523 = vmatpush1.bf16.msra.mxu0 %v498
        %524 = vmatprep.subr.bf16.mxu0 0
        %525 = vmatpush1.bf16.msra.mxu0 %v497
        %526 = vmatprep.subr.bf16.mxu0 0
        %527 = vmatpush1.bf16.msra.mxu0 %v496
        %528 = vmatprep.subr.bf16.mxu0 0
        %529 = vmatpush2.bf16.msra.mxu0 0
        %530 = vmatprep.subr.bf16.mxu0 0
        %531 = vmatpush2.bf16.msra.mxu0 0
        %532 = vmatprep.subr.bf16.mxu0 0
        %533 = vmatpush2.bf16.msra.mxu0 0
        %534 = vmatprep.subr.bf16.mxu0 0
        %535 = vmatpush2.bf16.msra.mxu0 0
        %536 = vmatprep.subr.bf16.mxu0 0
        %537 = vmatpush2.bf16.msra.mxu0 0
        %538 = vmatprep.subr.bf16.mxu0 0
        %539 = vmatpush2.bf16.msra.mxu0 0
        %540 = vmatprep.subr.bf16.mxu0 0
        %541 = vmatpush2.bf16.msra.mxu0 0
        %542 = vmatprep.subr.bf16.mxu0 0
        %543 = vmatpush2.bf16.msra.mxu0 0
        %544 = vmatprep.mubr.bf16.mxu0 0
        %545 = vmatmul.mubr.bf16.gmra.mxu0 %v432
        %v546 = vpop.f32.mrf.mxu0
        %v547 = vadd.f32 %v366, %v546
        %v548 = vpop.f32.mrf.mxu0
        %v549 = vpop.f32.mrf.mxu0
        %v550 = vadd.f32 %v367, %v549
        %v551 = vpop.f32.mrf.mxu0
        %552 = vmatprep.mubr.bf16.mxu0 0
        %553 = vmatmul.mubr.bf16.gmra.mxu0 %v433
        %v554 = vpop.f32.mrf.mxu0
        %v555 = vadd.f32 %v366, %v554
        %v556 = vpop.f32.mrf.mxu0
        %v557 = vpop.f32.mrf.mxu0
        %v558 = vadd.f32 %v367, %v557
        %v559 = vpop.f32.mrf.mxu0
        %560 = vmatprep.mubr.bf16.mxu0 0
        %561 = vmatmul.mubr.bf16.gmra.mxu0 %v434
        %v562 = vpop.f32.mrf.mxu0
        %v563 = vadd.f32 %v366, %v562
        %v564 = vpop.f32.mrf.mxu0
        %v565 = vpop.f32.mrf.mxu0
        %v566 = vadd.f32 %v367, %v565
        %v567 = vpop.f32.mrf.mxu0
        %568 = vmatprep.mubr.bf16.mxu0 0
        %569 = vmatmul.mubr.bf16.gmra.mxu0 %v435
        %v570 = vpop.f32.mrf.mxu0
        %v571 = vadd.f32 %v366, %v570
        %v572 = vpop.f32.mrf.mxu0
        %v573 = vpop.f32.mrf.mxu0
        %v574 = vadd.f32 %v367, %v573
        %v575 = vpop.f32.mrf.mxu0
        %576 = vmatprep.mubr.bf16.mxu0 0
        %577 = vmatmul.mubr.bf16.gmra.mxu0 %v436
        %v578 = vpop.f32.mrf.mxu0
        %v579 = vadd.f32 %v366, %v578
        %v580 = vpop.f32.mrf.mxu0
        %v581 = vpop.f32.mrf.mxu0
        %v582 = vadd.f32 %v367, %v581
        %v583 = vpop.f32.mrf.mxu0
        %584 = vmatprep.mubr.bf16.mxu0 0
        %585 = vmatmul.mubr.bf16.gmra.mxu0 %v437
        %v586 = vpop.f32.mrf.mxu0
        %v587 = vadd.f32 %v366, %v586
        %v588 = vpop.f32.mrf.mxu0
        %v589 = vpop.f32.mrf.mxu0
        %v590 = vadd.f32 %v367, %v589
        %v591 = vpop.f32.mrf.mxu0
        %592 = vmatprep.mubr.bf16.mxu0 0
        %593 = vmatmul.mubr.bf16.gmra.mxu0 %v438
        %v594 = vpop.f32.mrf.mxu0
        %v595 = vadd.f32 %v366, %v594
        %v596 = vpop.f32.mrf.mxu0
        %v597 = vpop.f32.mrf.mxu0
        %v598 = vadd.f32 %v367, %v597
        %v599 = vpop.f32.mrf.mxu0
        %600 = vmatprep.mubr.bf16.mxu0 0
        %601 = vmatmul.mubr.bf16.gmra.mxu0 %v439
        %v602 = vpop.f32.mrf.mxu0
        %v603 = vadd.f32 %v366, %v602
        %v604 = vpop.f32.mrf.mxu0
        %v605 = vpop.f32.mrf.mxu0
        %v606 = vadd.f32 %v367, %v605
        %v607 = vpop.f32.mrf.mxu0
        %608 = vmatprep.mubr.bf16.mxu0 0
        %609 = vmatmul.mubr.bf16.gmra.mxu0 %v440
        %v610 = vpop.f32.mrf.mxu0
        %v611 = vadd.f32 %v366, %v610
        %v612 = vpop.f32.mrf.mxu0
        %v613 = vpop.f32.mrf.mxu0
        %v614 = vadd.f32 %v367, %v613
        %v615 = vpop.f32.mrf.mxu0
        %616 = vmatprep.mubr.bf16.mxu0 0
        %617 = vmatmul.mubr.bf16.gmra.mxu0 %v441
        %v618 = vpop.f32.mrf.mxu0
        %v619 = vadd.f32 %v366, %v618
        %v620 = vpop.f32.mrf.mxu0
        %v621 = vpop.f32.mrf.mxu0
        %v622 = vadd.f32 %v367, %v621
        %v623 = vpop.f32.mrf.mxu0
        %624 = vmatprep.mubr.bf16.mxu0 0
        %625 = vmatmul.mubr.bf16.gmra.mxu0 %v442
        %v626 = vpop.f32.mrf.mxu0
        %v627 = vadd.f32 %v366, %v626
        %v628 = vpop.f32.mrf.mxu0
        %v629 = vpop.f32.mrf.mxu0
        %v630 = vadd.f32 %v367, %v629
        %v631 = vpop.f32.mrf.mxu0
        %632 = vmatprep.mubr.bf16.mxu0 0
        %633 = vmatmul.mubr.bf16.gmra.mxu0 %v443
        %v634 = vpop.f32.mrf.mxu0
        %v635 = vadd.f32 %v366, %v634
        %v636 = vpop.f32.mrf.mxu0
        %v637 = vpop.f32.mrf.mxu0
        %v638 = vadd.f32 %v367, %v637
        %v639 = vpop.f32.mrf.mxu0
        %640 = vmatprep.mubr.bf16.mxu0 0
        %641 = vmatmul.mubr.bf16.gmra.mxu0 %v444
        %v642 = vpop.f32.mrf.mxu0
        %v643 = vadd.f32 %v366, %v642
        %v644 = vpop.f32.mrf.mxu0
        %v645 = vpop.f32.mrf.mxu0
        %v646 = vadd.f32 %v367, %v645
        %v647 = vpop.f32.mrf.mxu0
        %648 = vmatprep.mubr.bf16.mxu0 0
        %649 = vmatmul.mubr.bf16.gmra.mxu0 %v445
        %v650 = vpop.f32.mrf.mxu0
        %v651 = vadd.f32 %v366, %v650
        %v652 = vpop.f32.mrf.mxu0
        %v653 = vpop.f32.mrf.mxu0
        %v654 = vadd.f32 %v367, %v653
        %v655 = vpop.f32.mrf.mxu0
        %656 = vmatprep.mubr.bf16.mxu0 0
        %657 = vmatmul.mubr.bf16.gmra.mxu0 %v446
        %v658 = vpop.f32.mrf.mxu0
        %v659 = vadd.f32 %v366, %v658
        %v660 = vpop.f32.mrf.mxu0
        %v661 = vpop.f32.mrf.mxu0
        %v662 = vadd.f32 %v367, %v661
        %v663 = vpop.f32.mrf.mxu0
        %664 = vmatprep.mubr.bf16.mxu0 0
        %665 = vmatmul.mubr.bf16.gmra.mxu0 %v447
        %v666 = vpop.f32.mrf.mxu0
        %v667 = vadd.f32 %v366, %v666
        %v668 = vpop.f32.mrf.mxu0
        %v669 = vpop.f32.mrf.mxu0
        %v670 = vadd.f32 %v367, %v669
        %v671 = vpop.f32.mrf.mxu0
        %672 = vdwg.mxu0
        %v673 = vmax.f32 %v547, %v550
        %v674 = vrot.slane %v673, 4
        %v675 = vmax.f32 %v673, %v674
        %v676 = vrot.slane %v675, 2
        %v677 = vmax.f32 %v675, %v676
        %v678 = vrot.slane %v677, 1
        %v679 = vmax.f32 %v677, %v678
        %v680 = vmax.f32 %v555, %v558
        %v681 = vrot.slane %v680, 4
        %v682 = vmax.f32 %v680, %v681
        %v683 = vrot.slane %v682, 2
        %v684 = vmax.f32 %v682, %v683
        %v685 = vrot.slane %v684, 1
        %v686 = vmax.f32 %v684, %v685
        %v687 = vmax.f32 %v563, %v566
        %v688 = vrot.slane %v687, 4
        %v689 = vmax.f32 %v687, %v688
        %v690 = vrot.slane %v689, 2
        %v691 = vmax.f32 %v689, %v690
        %v692 = vrot.slane %v691, 1
        %v693 = vmax.f32 %v691, %v692
        %v694 = vmax.f32 %v571, %v574
        %v695 = vrot.slane %v694, 4
        %v696 = vmax.f32 %v694, %v695
        %v697 = vrot.slane %v696, 2
        %v698 = vmax.f32 %v696, %v697
        %v699 = vrot.slane %v698, 1
        %v700 = vmax.f32 %v698, %v699
        %v701 = vmax.f32 %v579, %v582
        %v702 = vrot.slane %v701, 4
        %v703 = vmax.f32 %v701, %v702
        %v704 = vrot.slane %v703, 2
        %v705 = vmax.f32 %v703, %v704
        %v706 = vrot.slane %v705, 1
        %v707 = vmax.f32 %v705, %v706
        %v708 = vmax.f32 %v587, %v590
        %v709 = vrot.slane %v708, 4
        %v710 = vmax.f32 %v708, %v709
        %v711 = vrot.slane %v710, 2
        %v712 = vmax.f32 %v710, %v711
        %v713 = vrot.slane %v712, 1
        %v714 = vmax.f32 %v712, %v713
        %v715 = vmax.f32 %v595, %v598
        %v716 = vrot.slane %v715, 4
        %v717 = vmax.f32 %v715, %v716
        %v718 = vrot.slane %v717, 2
        %v719 = vmax.f32 %v717, %v718
        %v720 = vrot.slane %v719, 1
        %v721 = vmax.f32 %v719, %v720
        %v722 = vmax.f32 %v603, %v606
        %v723 = vrot.slane %v722, 4
        %v724 = vmax.f32 %v722, %v723
        %v725 = vrot.slane %v724, 2
        %v726 = vmax.f32 %v724, %v725
        %v727 = vrot.slane %v726, 1
        %v728 = vmax.f32 %v726, %v727
        %v729 = vmax.f32 %v611, %v614
        %v730 = vrot.slane %v729, 4
        %v731 = vmax.f32 %v729, %v730
        %v732 = vrot.slane %v731, 2
        %v733 = vmax.f32 %v731, %v732
        %v734 = vrot.slane %v733, 1
        %v735 = vmax.f32 %v733, %v734
        %v736 = vmax.f32 %v619, %v622
        %v737 = vrot.slane %v736, 4
        %v738 = vmax.f32 %v736, %v737
        %v739 = vrot.slane %v738, 2
        %v740 = vmax.f32 %v738, %v739
        %v741 = vrot.slane %v740, 1
        %v742 = vmax.f32 %v740, %v741
        %v743 = vmax.f32 %v627, %v630
        %v744 = vrot.slane %v743, 4
        %v745 = vmax.f32 %v743, %v744
        %v746 = vrot.slane %v745, 2
        %v747 = vmax.f32 %v745, %v746
        %v748 = vrot.slane %v747, 1
        %v749 = vmax.f32 %v747, %v748
        %v750 = vmax.f32 %v635, %v638
        %v751 = vrot.slane %v750, 4
        %v752 = vmax.f32 %v750, %v751
        %v753 = vrot.slane %v752, 2
        %v754 = vmax.f32 %v752, %v753
        %v755 = vrot.slane %v754, 1
        %v756 = vmax.f32 %v754, %v755
        %v757 = vmax.f32 %v643, %v646
        %v758 = vrot.slane %v757, 4
        %v759 = vmax.f32 %v757, %v758
        %v760 = vrot.slane %v759, 2
        %v761 = vmax.f32 %v759, %v760
        %v762 = vrot.slane %v761, 1
        %v763 = vmax.f32 %v761, %v762
        %v764 = vmax.f32 %v651, %v654
        %v765 = vrot.slane %v764, 4
        %v766 = vmax.f32 %v764, %v765
        %v767 = vrot.slane %v766, 2
        %v768 = vmax.f32 %v766, %v767
        %v769 = vrot.slane %v768, 1
        %v770 = vmax.f32 %v768, %v769
        %v771 = vmax.f32 %v659, %v662
        %v772 = vrot.slane %v771, 4
        %v773 = vmax.f32 %v771, %v772
        %v774 = vrot.slane %v773, 2
        %v775 = vmax.f32 %v773, %v774
        %v776 = vrot.slane %v775, 1
        %v777 = vmax.f32 %v775, %v776
        %v778 = vmax.f32 %v667, %v670
        %v779 = vrot.slane %v778, 4
        %v780 = vmax.f32 %v778, %v779
        %v781 = vrot.slane %v780, 2
        %v782 = vmax.f32 %v780, %v781
        %v783 = vrot.slane %v782, 1
        %v784 = vmax.f32 %v782, %v783
        %v785 = vld [vmem:[%s2] sm:$0x1]
        %v787 = vlaneseq
        %v788 = vshrl.u32 %v787, 7
        %v789 = vsub.s32 0, %v788
        %v790 = vrot.slane %v785, %v789
        %v792 = vadd.f32 %v679, %v790
        %v793 = vadd.f32 %v686, %v790
        %v794 = vadd.f32 %v693, %v790
        %v795 = vadd.f32 %v700, %v790
        %v796 = vadd.f32 %v707, %v790
        %v797 = vadd.f32 %v714, %v790
        %v798 = vadd.f32 %v721, %v790
        %v799 = vadd.f32 %v728, %v790
        %v800 = vadd.f32 %v735, %v790
        %v801 = vadd.f32 %v742, %v790
        %v802 = vadd.f32 %v749, %v790
        %v803 = vadd.f32 %v756, %v790
        %v804 = vadd.f32 %v763, %v790
        %v805 = vadd.f32 %v770, %v790
        %v806 = vadd.f32 %v777, %v790
        %v807 = vadd.f32 %v784, %v790
        %v808 = vmax.f32 %v792, 0.0
        %v809 = vmax.f32 %v793, 0.0
        %v810 = vmax.f32 %v794, 0.0
        %v811 = vmax.f32 %v795, 0.0
        %v812 = vmax.f32 %v796, 0.0
        %v813 = vmax.f32 %v797, 0.0
        %v814 = vmax.f32 %v798, 0.0
        %v815 = vmax.f32 %v799, 0.0
        %v816 = vmax.f32 %v800, 0.0
        %v817 = vmax.f32 %v801, 0.0
        %v818 = vmax.f32 %v802, 0.0
        %v819 = vmax.f32 %v803, 0.0
        %v820 = vmax.f32 %v804, 0.0
        %v821 = vmax.f32 %v805, 0.0
        %v822 = vmax.f32 %v806, 0.0
        %v823 = vmax.f32 %v807, 0.0
        %v824 = vpack.c.bf16 %v808, %v808
        %v825 = vpack.c.bf16 %v809, %v809
        %v826 = vpack.c.bf16 %v810, %v810
        %v827 = vpack.c.bf16 %v811, %v811
        %v828 = vpack.c.bf16 %v812, %v812
        %v829 = vpack.c.bf16 %v813, %v813
        %v830 = vpack.c.bf16 %v814, %v814
        %v831 = vpack.c.bf16 %v815, %v815
        %v832 = vpack.c.bf16 %v816, %v816
        %v833 = vpack.c.bf16 %v817, %v817
        %v834 = vpack.c.bf16 %v818, %v818
        %v835 = vpack.c.bf16 %v819, %v819
        %v836 = vpack.c.bf16 %v820, %v820
        %v837 = vpack.c.bf16 %v821, %v821
        %v838 = vpack.c.bf16 %v822, %v822
        %v839 = vpack.c.bf16 %v823, %v823
        %v840 = vld [vmem:[#allocation8] sm:$0xf]
        %v841 = vld [vmem:[#allocation8 + $0x4] sm:$0xf]
        %v842 = vld [vmem:[#allocation8 + $0x8] sm:$0xf]
        %v843 = vld [vmem:[#allocation8 + $0xc] sm:$0xf]
        %v844 = vld [vmem:[#allocation8 + $0x10] sm:$0xf]
        %v845 = vld [vmem:[#allocation8 + $0x14] sm:$0xf]
        %v846 = vld [vmem:[#allocation8 + $0x18] sm:$0xf]
        %v847 = vld [vmem:[#allocation8 + $0x1c] sm:$0xf]
        %v848 = vld [vmem:[#allocation8 + $0x20] sm:$0xf]
        %v849 = vld [vmem:[#allocation8 + $0x24] sm:$0xf]
        %v850 = vld [vmem:[#allocation8 + $0x28] sm:$0xf]
        %v851 = vld [vmem:[#allocation8 + $0x2c] sm:$0xf]
        %v852 = vld [vmem:[#allocation8 + $0x30] sm:$0xf]
        %v853 = vld [vmem:[#allocation8 + $0x34] sm:$0xf]
        %v854 = vld [vmem:[#allocation8 + $0x38] sm:$0xf]
        %v855 = vld [vmem:[#allocation8 + $0x3c] sm:$0xf]
        %v856 = vld [vmem:[%s5] sm:$0x1]
        %v858 = vlaneseq
        %v859 = vshrl.u32 %v858, 7
        %v860 = vsub.s32 0, %v859
        %v861 = vrot.slane %v856, %v860
        %v879 = vunpack.c.l.b16 %v824
        %v880 = vunpack.c.l.b16 %v825
        %v881 = vunpack.c.l.b16 %v826
        %v882 = vunpack.c.l.b16 %v827
        %v883 = vunpack.c.l.b16 %v828
        %v884 = vunpack.c.l.b16 %v829
        %v885 = vunpack.c.l.b16 %v830
        %v886 = vunpack.c.l.b16 %v831
        %v887 = vunpack.c.l.b16 %v832
        %v888 = vunpack.c.l.b16 %v833
        %v889 = vunpack.c.l.b16 %v834
        %v890 = vunpack.c.l.b16 %v835
        %v891 = vunpack.c.l.b16 %v836
        %v892 = vunpack.c.l.b16 %v837
        %v893 = vunpack.c.l.b16 %v838
        %v894 = vunpack.c.l.b16 %v839
        %v895 = vrot.slane %v880, 7
        %vm896 = vcmask 1041409
        %v897 = vsel %vm896, %v895, %v879
        %v898 = vrot.slane %v881, 6
        %vm899 = vcmask 1042434
        %v900 = vsel %vm899, %v898, %v897
        %v901 = vrot.slane %v882, 5
        %vm902 = vcmask 1043459
        %v903 = vsel %vm902, %v901, %v900
        %v904 = vrot.slane %v883, 4
        %vm905 = vcmask 1044484
        %v906 = vsel %vm905, %v904, %v903
        %v907 = vrot.slane %v884, 3
        %vm908 = vcmask 1045509
        %v909 = vsel %vm908, %v907, %v906
        %v910 = vrot.slane %v885, 2
        %vm911 = vcmask 1046534
        %v912 = vsel %vm911, %v910, %v909
        %v913 = vrot.slane %v886, 1
        %vm914 = vcmask 1047559
        %v915 = vsel %vm914, %v913, %v912
        %v916 = vrot.slane %v888, 7
        %v917 = vsel %vm896, %v916, %v887
        %v918 = vrot.slane %v889, 6
        %v919 = vsel %vm899, %v918, %v917
        %v920 = vrot.slane %v890, 5
        %v921 = vsel %vm902, %v920, %v919
        %v922 = vrot.slane %v891, 4
        %v923 = vsel %vm905, %v922, %v921
        %v924 = vrot.slane %v892, 3
        %v925 = vsel %vm908, %v924, %v923
        %v926 = vrot.slane %v893, 2
        %v927 = vsel %vm911, %v926, %v925
        %v928 = vrot.slane %v894, 1
        %v929 = vsel %vm914, %v928, %v927
        %v930 = vpack.c.b16 %v929, %v915
        %v948 = vunpack.c.l.b16 %v840
        %v949 = vunpack.c.l.b16 %v841
        %v950 = vunpack.c.l.b16 %v842
        %v951 = vunpack.c.l.b16 %v843
        %v952 = vunpack.c.l.b16 %v844
        %v953 = vunpack.c.l.b16 %v845
        %v954 = vunpack.c.l.b16 %v846
        %v955 = vunpack.c.l.b16 %v847
        %v956 = vunpack.c.l.b16 %v848
        %v957 = vunpack.c.l.b16 %v849
        %v958 = vunpack.c.l.b16 %v850
        %v959 = vunpack.c.l.b16 %v851
        %v960 = vunpack.c.l.b16 %v852
        %v961 = vunpack.c.l.b16 %v853
        %v962 = vunpack.c.l.b16 %v854
        %v963 = vunpack.c.l.b16 %v855
        %v964 = vpack.c.b16 %v949, %v948
        %v965 = vpack.c.b16 %v951, %v950
        %v966 = vpack.c.b16 %v953, %v952
        %v967 = vpack.c.b16 %v955, %v954
        %v968 = vpack.c.b16 %v957, %v956
        %v969 = vpack.c.b16 %v959, %v958
        %v970 = vpack.c.b16 %v961, %v960
        %v971 = vpack.c.b16 %v963, %v962
        %980 = vmatprep.subr.bf16.mxu0 0
        %981 = vmatpush1.bf16.msra.mxu0 %v971
        %982 = vmatprep.subr.bf16.mxu0 0
        %983 = vmatpush1.bf16.msra.mxu0 %v970
        %984 = vmatprep.subr.bf16.mxu0 0
        %985 = vmatpush1.bf16.msra.mxu0 %v969
        %986 = vmatprep.subr.bf16.mxu0 0
        %987 = vmatpush1.bf16.msra.mxu0 %v968
        %988 = vmatprep.subr.bf16.mxu0 0
        %989 = vmatpush1.bf16.msra.mxu0 %v967
        %990 = vmatprep.subr.bf16.mxu0 0
        %991 = vmatpush1.bf16.msra.mxu0 %v966
        %992 = vmatprep.subr.bf16.mxu0 0
        %993 = vmatpush1.bf16.msra.mxu0 %v965
        %994 = vmatprep.subr.bf16.mxu0 0
        %995 = vmatpush1.bf16.msra.mxu0 %v964
        %996 = vmatprep.subr.bf16.mxu0 0
        %997 = vmatpush2.bf16.msra.mxu0 0
        %998 = vmatprep.subr.bf16.mxu0 0
        %999 = vmatpush2.bf16.msra.mxu0 0
        %1000 = vmatprep.subr.bf16.mxu0 0
        %1001 = vmatpush2.bf16.msra.mxu0 0
        %1002 = vmatprep.subr.bf16.mxu0 0
        %1003 = vmatpush2.bf16.msra.mxu0 0
        %1004 = vmatprep.subr.bf16.mxu0 0
        %1005 = vmatpush2.bf16.msra.mxu0 0
        %1006 = vmatprep.subr.bf16.mxu0 0
        %1007 = vmatpush2.bf16.msra.mxu0 0
        %1008 = vmatprep.subr.bf16.mxu0 0
        %1009 = vmatpush2.bf16.msra.mxu0 0
        %1010 = vmatprep.subr.bf16.mxu0 0
        %1011 = vmatpush2.bf16.msra.mxu0 0
        %1012 = vmatprep.mubr.bf16.mxu0 0
        %1013 = vmatmul.mubr.bf16.gmra.mxu0 %v930
        %v1014 = vpop.f32.mrf.mxu0
        %v1015 = vadd.f32 %v861, %v1014
        %v1016 = vpop.f32.mrf.mxu0
        %v1017 = vpop.f32.mrf.mxu0
        %v1018 = vadd.f32 %v861, %v1017
        %v1019 = vpop.f32.mrf.mxu0
        %1020 = vdwg.mxu0
        %1021 = vst [vmem:[%s314] sm:$0xff] %v1015
        %1022 = vst [vmem:[%s314 + $0x8] sm:$0xff] %v1018
        %s1023 = sand.u32 %s164, 1
        %s1024 = scalar_lea.sflag [#allocation4], %s1023
        %s1025 = sand.u32 %s164, 1
        %s1026 = smul.addr %s1025, 16
        %s1027 = scalar_lea.vmem [#allocation10], %s1026
        // Predicated region
        $region61: #{tpu_custom_call.1} parent=43 // pred_check
          %p1028 = pneg %p174
        $region62: #{tpu_custom_call.1} parent=43 // pred_check_branch
          %1030 = sbr.rel (%p1028) target = $region64
        $region63: #{tpu_custom_call.1} parent=43 // pred_region
          %s1031 = smul.u32 2, %s25
          %s1033 = ssub.s32 256, 256
          %1034 = vsyncadd %s1024, %s1033
          %s1035 = smul.addr %s1031, 128
          %s1036 = scalar_lea.hbm %s6, %s1035
          %s1037 = sshll.u32 %s1027, 4
          %s1038 = int_to_ptr.vmem [resolvable:$true] %s1037
          %1043 = dma.vmem_to_hbm [thread:$0]  %s1038, 256, %s1036, %s1024, 128, 128, 8
        $region64: #{tpu_custom_call.1} parent=43 // pred_fallthru
          _
      $region44: #{tpu_custom_call.1} parent=5 // pred_fallthru
        _
      %p1044 = scmp.le.s32.totalorder 2, %s20
      // Predicated region
      $region65: #{tpu_custom_call.1} parent=5 // pred_check
        %p1045 = pneg %p1044
      $region66: #{tpu_custom_call.1} parent=5 // pred_check_branch
        %1047 = sbr.rel (%p1045) target = $region68
      $region67: #{tpu_custom_call.1} parent=5 // pred_region
        %s1048 = ssub.s32 %s20, 2
        // Predicated region
        $region69: #{tpu_custom_call.1} parent=67 // pred_check
          %p1049 = pneg %p180
        $region70: #{tpu_custom_call.1} parent=67 // pred_check_branch
          %1051 = sbr.rel (%p1049) target = $region72
        $region71: #{tpu_custom_call.1} parent=67 // pred_region
          %s1052 = sand.u32 %s165, 1
          %s1053 = scalar_lea.sflag [#allocation4], %s1052
          %s1054 = sand.u32 %s165, 1
          %s1055 = smul.addr %s1054, 16
          %s1056 = scalar_lea.vmem [#allocation10], %s1055
          %1057 = dma.done %s1053, 256
        $region72: #{tpu_custom_call.1} parent=67 // pred_fallthru
          _
      $region68: #{tpu_custom_call.1} parent=5 // pred_fallthru
        _
    $region6: #{tpu_custom_call.1} parent=1 // loop_footer
      %s24 = sadd.s32 1, %s20
    $region7: #{tpu_custom_call.1} parent=1 // loop_footer_branch
      %19 = sbr.rel target = $region3
    $region8: #{tpu_custom_call.1} parent=1 // loop_exit
      _
    %1058 = vsyncpa [#allocation3], 1
    %s1059 = scalar_lea.sflag [#allocation3], 1
    %1060 = vsyncpa %s1059, 1
    %1061 = vsyncpa [#allocation6], 1
    %1062 = vsyncpa [#allocation9], 1
    %1063 = vsyncpa [#allocation4], 1
    %s1064 = scalar_lea.sflag [#allocation4], 1
    %1065 = vsyncpa %s1064, 1

</llo_original>
